<compile_context>
chip_gen: v7x
topology: tpu7x:2x2x1
jax: 0.10.0
libtpu: 0.0.40
codegen_flags: <defaults>
</compile_context>

<pallas_src>
import functools

import jax
import jax.numpy as jnp
from jax.experimental import pallas as pl
from jax.experimental.pallas import tpu as pltpu


def _layernorm2d_kernel(x_ref, gamma_ref, beta_ref, o_ref, *, eps, inv_c, chunk):
    # x_ref / o_ref: (C, thw) block -- channels on sublanes, pixels on lanes.
    # gamma_ref / beta_ref: (C, 1), constant index map -> resident in VMEM.
    n_chunks = x_ref.shape[1] // chunk
    g = gamma_ref[...].astype(jnp.float32)          # (C, 1), hoisted out of loop
    b = beta_ref[...].astype(jnp.float32)

    def process(start):
        x = x_ref[:, pl.ds(start, chunk)].astype(jnp.float32)   # (C, chunk)
        # Independent XLU reduces over channels; fp32 accumulation.
        s = jnp.sum(x, axis=0, keepdims=True)                   # (1, chunk)
        ss = jnp.sum(x * x, axis=0, keepdims=True)               # (1, chunk)
        mean = s * inv_c
        var = jnp.maximum(ss * inv_c - mean * mean, 0.0)          # cancellation guard
        inv_std = jax.lax.rsqrt(var + eps)
        y = (x - mean) * inv_std * g + b
        o_ref[:, pl.ds(start, chunk)] = y.astype(o_ref.dtype)

    if n_chunks == 1:
        process(0)
    else:
        def body(i, carry):
            process(pl.multiple_of(i * chunk, chunk))
            return carry
        jax.lax.fori_loop(0, n_chunks, body, 0, unroll=True)


def _layernorm2d_small_kernel(x_ref, gamma_ref, beta_ref, o_ref, *, eps, inv_c):
    # Small-spatial path: x_ref is (Bb, C, HW) with HW < 128; reduce over axis=1.
    x = x_ref[...].astype(jnp.float32)
    s = jnp.sum(x, axis=1, keepdims=True)            # (Bb, 1, HW)
    ss = jnp.sum(x * x, axis=1, keepdims=True)
    mean = s * inv_c
    var = jnp.maximum(ss * inv_c - mean * mean, 0.0)
    inv_std = jax.lax.rsqrt(var + eps)
    g = gamma_ref[...].astype(jnp.float32)            # (1, C, 1)
    b = beta_ref[...].astype(jnp.float32)
    y = (x - mean) * inv_std * g + b
    o_ref[...] = y.astype(o_ref.dtype)


def layer_norm_2d(x_nchw, gamma, beta, *, eps=1e-5, block_bytes=1 * 1024 * 1024):
    """x_nchw: (B, C, H, W); gamma, beta: (C,). Returns (B, C, H, W)."""
    B, C, H, W = x_nchw.shape
    HW = H * W
    # NCHW -> (B, C, H*W): merging trailing contiguous dims is a free reshape.
    x3 = x_nchw.reshape(B, C, HW)
    itemsize = jnp.dtype(x_nchw.dtype).itemsize

    cost = pl.CostEstimate(
        flops=8 * B * C * HW,
        transcendentals=B * HW,
        bytes_accessed=2 * B * C * HW * itemsize
        + 2 * C * jnp.dtype(gamma.dtype).itemsize,
    )

    if HW < 128:
        # Small feature maps: pack several images per grid step so each step
        # carries a decent payload and the ~0.35us per-step cost is amortized.
        # TODO(synk): lane width HW < 128 means masked stores; padding HW to a
        # multiple of 128 in the caller would remove that cost for 7x7/14x14 maps.
        bb = max(1, min(B, (512 * 1024) // max(1, C * HW * 4)))
        grid = (pl.cdiv(B, bb),)
        out3 = pl.pallas_call(
            functools.partial(_layernorm2d_small_kernel, eps=eps, inv_c=1.0 / C),
            out_shape=jax.ShapeDtypeStruct((B, C, HW), x_nchw.dtype),
            grid=grid,
            in_specs=[
                pl.BlockSpec((bb, C, HW), lambda i: (i, 0, 0)),
                pl.BlockSpec((1, C, 1), lambda i: (0, 0, 0)),   # gamma (resident)
                pl.BlockSpec((1, C, 1), lambda i: (0, 0, 0)),   # beta  (resident)
            ],
            out_specs=pl.BlockSpec((bb, C, HW), lambda i: (i, 0, 0)),
            compiler_params=pltpu.CompilerParams(dimension_semantics=("parallel",)),
            cost_estimate=cost,
        )(x3, gamma.reshape(1, C, 1), beta.reshape(1, C, 1))
        return out3.reshape(B, C, H, W)

    # ---- Lane-dense main path (HW >= 128) ----
    # ~1 MiB blocks: at/after the HBM roofline knee on v5e/v6e/v7x; keeps total
    # live buffering (2x in + 2x out) a few MiB, under every scoped-VMEM default.
    target = max(128, block_bytes // max(1, C * itemsize))
    thw = min(HW, target)
    thw = max(128, (thw // 128) * 128)
    if B < 4:
        # Ensure several HW tiles so both v7x TensorCores get work and the
        # double-buffer has steps to overlap.
        want_hw_tiles = pl.cdiv(8, B)
        cap = max(128, ((HW // want_hw_tiles) // 128) * 128)
        thw = min(thw, cap)
    # In-kernel lane-chunk size: keep one chunk's fp32 upcast within ~32 vregs
    # so it stays in registers instead of becoming a VMEM temporary.
    chunk = max(128, min(thw, (((128 * 1024) // (C * 4)) // 128) * 128))
    thw = max(chunk, (thw // chunk) * chunk)   # make thw a multiple of chunk
    thw = min(thw, 8 * chunk)                  # bound the unrolled in-kernel loop
    grid = (B, pl.cdiv(HW, thw))               # ragged last HW tile handled by Pallas

    out3 = pl.pallas_call(
        functools.partial(_layernorm2d_kernel, eps=eps, inv_c=1.0 / C, chunk=chunk),
        out_shape=jax.ShapeDtypeStruct((B, C, HW), x_nchw.dtype),
        grid=grid,
        in_specs=[
            pl.BlockSpec((None, C, thw), lambda b, j: (b, 0, j)),   # x (batch squeezed)
            pl.BlockSpec((C, 1), lambda b, j: (0, 0)),              # gamma (resident)
            pl.BlockSpec((C, 1), lambda b, j: (0, 0)),              # beta  (resident)
        ],
        out_specs=pl.BlockSpec((None, C, thw), lambda b, j: (b, 0, j)),
        compiler_params=pltpu.CompilerParams(
            dimension_semantics=("parallel", "parallel"),
        ),
        cost_estimate=cost,
    )(x3, gamma.reshape(C, 1), beta.reshape(C, 1))
    return out3.reshape(B, C, H, W)


def _reference(x_nchw, gamma, beta, eps=1e-5):
    x = jnp.transpose(x_nchw, (0, 2, 3, 1)).astype(jnp.float32)
    mean = jnp.mean(x, axis=-1, keepdims=True)
    var = jnp.mean((x - mean) ** 2, axis=-1, keepdims=True)
    y = (x - mean) * jax.lax.rsqrt(var + eps)
    y = y * gamma.astype(jnp.float32) + beta.astype(jnp.float32)
    return jnp.transpose(y, (0, 3, 1, 2)).astype(x_nchw.dtype)


def _check(x, gamma, beta, atol, rtol):
    out = jax.block_until_ready(layer_norm_2d(x, gamma, beta))
    ref = _reference(x, gamma, beta)
    assert out.shape == x.shape and out.dtype == x.dtype
    assert jnp.allclose(out.astype(jnp.float32), ref.astype(jnp.float32),
                        atol=atol, rtol=rtol), (
        f"mismatch vs reference for shape={x.shape} dtype={x.dtype}")


if __name__ == "__main__":
    key = jax.random.PRNGKey(0)
    kx, kg, kb = jax.random.split(key, 3)

    # Primary case: embed_dim = C = 32, B=2, 16x16 spatial, f32.
    B, C, H, W = 2, 32, 16, 16
    x = jax.random.normal(kx, (B, C, H, W), dtype=jnp.float32)
    # nn.LayerNorm initializes weight=1, bias=0; perturb so the affine path is
    # exercised.
    gamma = jnp.ones((C,), jnp.float32) + 0.1 * jax.random.normal(kg, (C,), jnp.float32)
    beta = jnp.zeros((C,), jnp.float32) + 0.1 * jax.random.normal(kb, (C,), jnp.float32)
    _check(x, gamma, beta, atol=1e-5, rtol=1e-5)

    # bf16 input: exercises upcast/downcast path.
    _check(x.astype(jnp.bfloat16), gamma, beta, atol=3e-2, rtol=3e-2)

    # Ragged HW (192 = 128 + 64): exercises masked writeback of the last tile.
    xr = jax.random.normal(kx, (2, C, 16, 12), dtype=jnp.float32)
    _check(xr, gamma, beta, atol=1e-5, rtol=1e-5)

    # Small spatial map (7x7 < 128 lanes): exercises the batched small path.
    xs = jax.random.normal(kb, (3, C, 7, 7), dtype=jnp.float32)
    _check(xs, gamma, beta, atol=1e-5, rtol=1e-5)

    # Multi-chunk in-kernel loop (thw > chunk): B=4, C=64, 32x32.
    kx2, kg2, kb2 = jax.random.split(kg, 3)
    xm = jax.random.normal(kx2, (4, 64, 32, 32), dtype=jnp.float32)
    gm = jnp.ones((64,), jnp.float32) + 0.1 * jax.random.normal(kg2, (64,), jnp.float32)
    bm = 0.1 * jax.random.normal(kb2, (64,), jnp.float32)
    _check(xm, gm, bm, atol=1e-5, rtol=1e-5)

    print("KERNEL_OK")
</pallas_src>

<mosaic_0001>
module attributes {stable_mosaic.version = 11 : i64} {
  func.func @_layernorm2d_kernel(%arg0: i32, %arg1: i32, %arg2: memref<1x32x128xf32, #tpu.memory_space<vmem>>, %arg3: memref<32x1xf32, #tpu.memory_space<vmem>>, %arg4: memref<32x1xf32, #tpu.memory_space<vmem>>, %arg5: memref<1x32x128xf32, #tpu.memory_space<vmem>>) attributes {dimension_semantics = [#tpu.dimension_semantics<parallel>, #tpu.dimension_semantics<parallel>], iteration_bounds = array<i64: 2, 2>, scalar_prefetch = 0 : i64, scratch_operands = 0 : i64, tpu.core_type = #tpu.core_type<tc>, window_params = [{transform_indices = @transform_0, window_bounds = array<i64: 1, 32, 128>}, {pipeline_mode = #tpu.pipeline_mode<synchronous>, transform_indices = @transform_1, window_bounds = array<i64: 32, 1>}, {pipeline_mode = #tpu.pipeline_mode<synchronous>, transform_indices = @transform_2, window_bounds = array<i64: 32, 1>}, {transform_indices = @transform_3, window_bounds = array<i64: 1, 32, 128>}]} {
    %c0 = arith.constant 0 : index
    %c0_0 = arith.constant 0 : index
    %0 = vector.load %arg3[%c0, %c0_0] : memref<32x1xf32, #tpu.memory_space<vmem>>, vector<32x1xf32>
    %c0_1 = arith.constant 0 : index
    %c0_2 = arith.constant 0 : index
    %1 = vector.load %arg4[%c0_1, %c0_2] : memref<32x1xf32, #tpu.memory_space<vmem>>, vector<32x1xf32>
    %c0_3 = arith.constant 0 : index
    %c0_4 = arith.constant 0 : index
    %c0_5 = arith.constant 0 : index
    %2 = vector.load %arg2[%c0_3, %c0_4, %c0_5] : memref<1x32x128xf32, #tpu.memory_space<vmem>>, vector<1x32x128xf32>
    %3 = vector.shape_cast %2 : vector<1x32x128xf32> to vector<32x128xf32>
    %cst = arith.constant dense<0.000000e+00> : vector<128xf32>
    %4 = vector.multi_reduction <add>, %3, %cst [0] : vector<32x128xf32> to vector<128xf32>
    %5 = vector.shape_cast %4 : vector<128xf32> to vector<1x128xf32>
    %6 = arith.mulf %3, %3 : vector<32x128xf32>
    %cst_6 = arith.constant dense<0.000000e+00> : vector<128xf32>
    %7 = vector.multi_reduction <add>, %6, %cst_6 [0] : vector<32x128xf32> to vector<128xf32>
    %8 = vector.shape_cast %7 : vector<128xf32> to vector<1x128xf32>
    %cst_7 = arith.constant 3.125000e-02 : f32
    %9 = vector.broadcast %cst_7 : f32 to vector<1x128xf32>
    %10 = arith.mulf %5, %9 : vector<1x128xf32>
    %cst_8 = arith.constant 3.125000e-02 : f32
    %11 = vector.broadcast %cst_8 : f32 to vector<1x128xf32>
    %12 = arith.mulf %8, %11 : vector<1x128xf32>
    %13 = arith.mulf %10, %10 : vector<1x128xf32>
    %14 = arith.subf %12, %13 : vector<1x128xf32>
    %cst_9 = arith.constant 0.000000e+00 : f32
    %15 = vector.broadcast %cst_9 : f32 to vector<1x128xf32>
    %16 = arith.maximumf %14, %15 : vector<1x128xf32>
    %cst_10 = arith.constant 9.99999974E-6 : f32
    %17 = vector.broadcast %cst_10 : f32 to vector<1x128xf32>
    %18 = arith.addf %16, %17 : vector<1x128xf32>
    %19 = math.rsqrt %18 : vector<1x128xf32>
    %20 = vector.broadcast %10 : vector<1x128xf32> to vector<32x128xf32>
    %21 = arith.subf %3, %20 : vector<32x128xf32>
    %22 = vector.broadcast %19 : vector<1x128xf32> to vector<32x128xf32>
    %23 = arith.mulf %21, %22 : vector<32x128xf32>
    %24 = vector.broadcast %0 : vector<32x1xf32> to vector<32x128xf32>
    %25 = arith.mulf %23, %24 : vector<32x128xf32>
    %26 = vector.broadcast %1 : vector<32x1xf32> to vector<32x128xf32>
    %27 = arith.addf %25, %26 : vector<32x128xf32>
    %c0_11 = arith.constant 0 : index
    %c0_12 = arith.constant 0 : index
    %c0_13 = arith.constant 0 : index
    %28 = vector.load %arg5[%c0_11, %c0_12, %c0_13] : memref<1x32x128xf32, #tpu.memory_space<vmem>>, vector<1x32x128xf32>
    %29 = vector.shape_cast %28 : vector<1x32x128xf32> to vector<32x128xf32>
    %30 = vector.shape_cast %27 : vector<32x128xf32> to vector<1x32x128xf32>
    tpu.vector_store %arg5[%c0_11, %c0_12, %c0_13], %30 {strides = array<i32>} : memref<1x32x128xf32, #tpu.memory_space<vmem>>, vector<1x32x128xf32>,
    return
  }
  func.func @transform_0(%arg0: i32, %arg1: i32) -> (i32, i32, i32) {
    %c0_i32 = arith.constant 0 : i32
    %c0_i32_0 = arith.constant 0 : i32
    return %arg0, %c0_i32, %arg1 : i32, i32, i32
  }
  func.func @transform_1(%arg0: i32, %arg1: i32) -> (i32, i32) {
    %c0_i32 = arith.constant 0 : i32
    %c0_i32_0 = arith.constant 0 : i32
    %c0_i32_1 = arith.constant 0 : i32
    return %c0_i32, %c0_i32_0 : i32, i32
  }
  func.func @transform_2(%arg0: i32, %arg1: i32) -> (i32, i32) {
    %c0_i32 = arith.constant 0 : i32
    %c0_i32_0 = arith.constant 0 : i32
    %c0_i32_1 = arith.constant 0 : i32
    return %c0_i32, %c0_i32_0 : i32, i32
  }
  func.func @transform_3(%arg0: i32, %arg1: i32) -> (i32, i32, i32) {
    %c0_i32 = arith.constant 0 : i32
    %c0_i32_0 = arith.constant 0 : i32
    return %arg0, %c0_i32, %arg1 : i32, i32, i32
  }
}

</mosaic_0001>

<llo_original>
// kernel: tpu_custom_call.1
$region0: #{tpu_custom_call.1}
  #allocation0 [shape = 'u32[]', space=smem, size = 0x4, offset = 0x4, fixed_abs, tag = 'smem constant byte address 0x4 - core index']
  #allocation1 [shape = 'u32[144,128]{1,0:T(1,128)}', space=vmem, size = 0x12000, scoped, tag = 'internal scratch']
  %s0 = inlined_call_operand.hbm [shape: f32[2,32,256], index: 0, kind: input, shape index: {}]
  %s1 = inlined_call_operand.vmem [shape: f32[32,1], index: 1, kind: input, shape index: {}]
  %s2 = inlined_call_operand.vmem [shape: f32[32,1], index: 2, kind: input, shape index: {}]
  %s3 = inlined_call_operand.hbm [shape: f32[2,32,256], index: 3, kind: output, shape index: {}]
  %s4 = sld [smem:[#allocation0]]
  $region49: #{tpu_custom_call.1} parent=0
    _
  %s6 = ssub.s32 1, %s4
  %s7 = scalar_select 0, %s6, %s4
  $region1: #{tpu_custom_call.1} parent=0
    #allocation2 [shape = 'u8[32768]{0}', space=vmem, size = 0x8000, scoped, tag = 'input window, operand 0']
    #allocation3 [shape = 's32[2]{0}', space=sflag, size = 0x8, scoped, tag = 'scoped memory for tpu_custom_call.1']
    #allocation4 [shape = 's32[2]{0}', space=sflag, size = 0x8, scoped, tag = 'scoped memory for tpu_custom_call.1']
    #allocation5 [shape = 'u8[32768]{0}', space=vmem, size = 0x8000, scoped, tag = 'output window, operand 0']
    %8 = vsyncpa [#allocation3], 0
    %s9 = scalar_lea.sflag [#allocation3], 1
    %10 = vsyncpa %s9, 0
    %11 = vsyncpa [#allocation4], 0
    %s12 = scalar_lea.sflag [#allocation4], 1
    %13 = vsyncpa %s12, 0
    loop: start=0, step=1, limit=6
    $region2: #{tpu_custom_call.1} parent=1 // loop_pre_header
      _
    $region3: #{tpu_custom_call.1} parent=1 // loop_header
      %s15 = sphi 0, %s19
      %p16 = scmp.ge.s32.totalorder %s15, 6
      %s22 = sphi 0, %s34
      %s23 = sphi 0, %s30
      %s24 = sphi 0, %s22
      %s25 = sphi 0, %s23
      %s26 = sphi 0, %s24
      %s27 = sphi 0, %s25
      %s39 = sphi 0, %s41
      %s42 = sphi 0, %s39
      %s43 = sphi 0, %s42
      %s59 = sphi 0, %s43
      %s63 = sphi 0, %s63
      %s65 = sphi 0, %s63
      %s66 = sphi 0, %s65
      %s80 = sphi 0, %s66
      %s84 = sphi 0, %s84
      %s86 = sphi 0, %s84
      %s87 = sphi 0, %s86
      %s101 = sphi 0, %s87
      %s109 = sphi 0, %s111
      %s112 = sphi 0, %s109
      %s113 = sphi 0, %s112
      %s129 = sphi 0, %s113
    $region4: #{tpu_custom_call.1} parent=1 // loop_header_branch
      %18 = sbr.rel (%p16) target = $region8
    $region5: #{tpu_custom_call.1} parent=1 // loop_body
      %s20 = ssub.s32 %s15, 1
      %s21 = ssub.s32 %s15, 2
      %s28 = sadd.s32 1, %s23
      %p29 = scmp.ge.s32.totalorder %s28, 2
      %s30 = scalar_select %p29, 0, %s28
      %s31 = sadd.s32 1, %s22
      %s32 = scalar_select %p29, %s31, %s22
      %p33 = scmp.ge.s32.totalorder %s32, 2
      %s34 = scalar_select %p33, 0, %s32
      %s35 = ssub.s32 %s22, %s34
      %s36 = ssub.s32 %s23, %s30
      %s37 = sor.u32 %s35, %s36
      %p38 = scmp.eq.s32.totalorder %s37, 0
      %s40 = sadd.s32 %s39, 1
      %s41 = scalar_select %p38, %s39, %s40
      %p44 = pneg %p38
      %p45 = scmp.eq.s32.totalorder %s15, 3
      %p46 = por %p44, %p45
      %p47 = scmp.ne.s32.totalorder %s39, %s42
      %p48 = scmp.eq.s32.totalorder %s15, 0
      %p49 = por %p47, %p48
      %p50 = scmp.ne.s32.totalorder %s39, %s42
      %p51 = scmp.eq.s32.totalorder %s20, 3
      %p52 = por %p50, %p51
      %p53 = scmp.ne.s32.totalorder %s42, %s43
      %p54 = scmp.eq.s32.totalorder %s20, 0
      %p55 = por %p53, %p54
      %p56 = scmp.ne.s32.totalorder %s42, %s43
      %p57 = scmp.eq.s32.totalorder %s21, 3
      %p58 = por %p56, %p57
      %p60 = scmp.ne.s32.totalorder %s43, %s59
      %p61 = scmp.eq.s32.totalorder %s21, 0
      %p62 = por %p60, %p61
      %s64 = sadd.s32 %s63, 1
      %p67 = scmp.eq.s32.totalorder %s15, 3
      %p68 = scmp.ne.s32.totalorder %s63, %s65
      %p69 = scmp.eq.s32.totalorder %s15, 0
      %p70 = por %p68, %p69
      %p71 = scmp.ne.s32.totalorder %s63, %s65
      %p72 = scmp.eq.s32.totalorder %s20, 3
      %p73 = por %p71, %p72
      %p74 = scmp.ne.s32.totalorder %s65, %s66
      %p75 = scmp.eq.s32.totalorder %s20, 0
      %p76 = por %p74, %p75
      %p77 = scmp.ne.s32.totalorder %s65, %s66
      %p78 = scmp.eq.s32.totalorder %s21, 3
      %p79 = por %p77, %p78
      %p81 = scmp.ne.s32.totalorder %s66, %s80
      %p82 = scmp.eq.s32.totalorder %s21, 0
      %p83 = por %p81, %p82
      %s85 = sadd.s32 %s84, 1
      %p88 = scmp.eq.s32.totalorder %s15, 3
      %p89 = scmp.ne.s32.totalorder %s84, %s86
      %p90 = scmp.eq.s32.totalorder %s15, 0
      %p91 = por %p89, %p90
      %p92 = scmp.ne.s32.totalorder %s84, %s86
      %p93 = scmp.eq.s32.totalorder %s20, 3
      %p94 = por %p92, %p93
      %p95 = scmp.ne.s32.totalorder %s86, %s87
      %p96 = scmp.eq.s32.totalorder %s20, 0
      %p97 = por %p95, %p96
      %p98 = scmp.ne.s32.totalorder %s86, %s87
      %p99 = scmp.eq.s32.totalorder %s21, 3
      %p100 = por %p98, %p99
      %p102 = scmp.ne.s32.totalorder %s87, %s101
      %p103 = scmp.eq.s32.totalorder %s21, 0
      %p104 = por %p102, %p103
      %s105 = ssub.s32 %s22, %s34
      %s106 = ssub.s32 %s23, %s30
      %s107 = sor.u32 %s105, %s106
      %p108 = scmp.eq.s32.totalorder %s107, 0
      %s110 = sadd.s32 %s109, 1
      %s111 = scalar_select %p108, %s109, %s110
      %p114 = pneg %p108
      %p115 = scmp.eq.s32.totalorder %s15, 3
      %p116 = por %p114, %p115
      %p117 = scmp.ne.s32.totalorder %s109, %s112
      %p118 = scmp.eq.s32.totalorder %s15, 0
      %p119 = por %p117, %p118
      %p120 = scmp.ne.s32.totalorder %s109, %s112
      %p121 = scmp.eq.s32.totalorder %s20, 3
      %p122 = por %p120, %p121
      %p123 = scmp.ne.s32.totalorder %s112, %s113
      %p124 = scmp.eq.s32.totalorder %s20, 0
      %p125 = por %p123, %p124
      %p126 = scmp.ne.s32.totalorder %s112, %s113
      %p127 = scmp.eq.s32.totalorder %s21, 3
      %p128 = por %p126, %p127
      %p130 = scmp.ne.s32.totalorder %s113, %s129
      %p131 = scmp.eq.s32.totalorder %s21, 0
      %p132 = por %p130, %p131
      %p133 = scmp.le.s32.totalorder 1, %s15
      %p134 = scmp.lt.s32.totalorder %s15, 5
      %p135 = pnand %p133, %p134
      %p136 = pneg %p135
      // Predicated region
      $region9: #{tpu_custom_call.1} parent=5 // pred_check
        _
      $region10: #{tpu_custom_call.1} parent=5 // pred_check_branch
        %138 = sbr.rel (%p135) target = $region12
      $region11: #{tpu_custom_call.1} parent=5 // pred_region
        %s139 = ssub.s32 %s15, 1
        // Predicated region
        $region13: #{tpu_custom_call.1} parent=11 // pred_check
          %p140 = pneg %p76
        $region14: #{tpu_custom_call.1} parent=11 // pred_check_branch
          %142 = sbr.rel (%p140) target = $region16
        $region15: #{tpu_custom_call.1} parent=11 // pred_region
          _
        $region16: #{tpu_custom_call.1} parent=11 // pred_fallthru
          _
        // Predicated region
        $region17: #{tpu_custom_call.1} parent=11 // pred_check
          %p143 = pneg %p97
        $region18: #{tpu_custom_call.1} parent=11 // pred_check_branch
          %145 = sbr.rel (%p143) target = $region20
        $region19: #{tpu_custom_call.1} parent=11 // pred_region
          _
        $region20: #{tpu_custom_call.1} parent=11 // pred_fallthru
          _
      $region12: #{tpu_custom_call.1} parent=5 // pred_fallthru
        _
      %p146 = scmp.lt.s32.totalorder %s15, 4
      // Predicated region
      $region21: #{tpu_custom_call.1} parent=5 // pred_check
        %p147 = pneg %p146
      $region22: #{tpu_custom_call.1} parent=5 // pred_check_branch
        %149 = sbr.rel (%p147) target = $region24
      $region23: #{tpu_custom_call.1} parent=5 // pred_region
        // Predicated region
        $region25: #{tpu_custom_call.1} parent=23 // pred_check
          %p150 = pneg %p49
        $region26: #{tpu_custom_call.1} parent=23 // pred_check_branch
          %152 = sbr.rel (%p150) target = $region28
        $region27: #{tpu_custom_call.1} parent=23 // pred_region
          %s153 = sand.u32 %s39, 1
          %s154 = scalar_lea.sflag [#allocation3], %s153
          %s155 = sand.u32 %s39, 1
          %s156 = smul.addr %s155, 32
          %s157 = scalar_lea.vmem [#allocation2], %s156
          %s159 = ssub.s32 512, 512
          %160 = vsyncadd %s154, %s159
          %s161 = smul.addr %s22, 8
          %s162 = sadd.s32 %s23, %s161
          %s163 = smul.addr %s162, 128
          %s164 = scalar_lea.hbm %s0, %s163
          %s165 = sshll.u32 %s157, 4
          %s166 = int_to_ptr.vmem [resolvable:$true] %s165
          %171 = dma.hbm_to_vmem [thread:$0]  %s164, 512, %s166, %s154, 256, 128, 8
        $region28: #{tpu_custom_call.1} parent=23 // pred_fallthru
          _
      $region24: #{tpu_custom_call.1} parent=5 // pred_fallthru
        _
      %p172 = scmp.le.s32.totalorder 1, %s15
      %p173 = scmp.lt.s32.totalorder %s15, 5
      %p174 = pnand %p172, %p173
      %p175 = pneg %p174
      // Predicated region
      $region29: #{tpu_custom_call.1} parent=5 // pred_check
        _
      $region30: #{tpu_custom_call.1} parent=5 // pred_check_branch
        %177 = sbr.rel (%p174) target = $region32
      $region31: #{tpu_custom_call.1} parent=5 // pred_region
        %s178 = ssub.s32 %s15, 1
        %s179 = sand.u32 %s42, 1
        %s180 = scalar_lea.sflag [#allocation3], %s179
        %s181 = sand.u32 %s42, 1
        %s182 = smul.addr %s181, 32
        %s183 = scalar_lea.vmem [#allocation2], %s182
        // Predicated region
        $region33: #{tpu_custom_call.1} parent=31 // pred_check
          %p184 = pneg %p55
        $region34: #{tpu_custom_call.1} parent=31 // pred_check_branch
          %186 = sbr.rel (%p184) target = $region36
        $region35: #{tpu_custom_call.1} parent=31 // pred_region
          %187 = dma.done %s180, 512
        $region36: #{tpu_custom_call.1} parent=31 // pred_fallthru
          _
        %s188 = sand.u32 %s42, 1
        %s189 = scalar_lea.sflag [#allocation3], %s188
        %s190 = sand.u32 %s42, 1
        %s191 = smul.addr %s190, 32
        %s192 = scalar_lea.vmem [#allocation2], %s191
        %p193 = pneg %p55
        %p194 = pneg %p52
        %p195 = pneg %p76
        %p196 = pneg %p73
        %p197 = pneg %p97
        %p198 = pneg %p94
        %p199 = pneg %p125
        %p200 = pneg %p122
        %s201 = sand.u32 %s112, 1
        %s202 = scalar_lea.sflag [#allocation4], %s201
        %s203 = sand.u32 %s112, 1
        %s204 = smul.addr %s203, 32
        %s205 = scalar_lea.vmem [#allocation5], %s204
        %v206 = vld [vmem:[%s1] sm:$0xff]
        %v207 = vld [vmem:[%s1 + $0x8] sm:$0xff]
        %v208 = vld [vmem:[%s1 + $0x10] sm:$0xff]
        %v209 = vld [vmem:[%s1 + $0x18] sm:$0xff]
        %v210 = vld [vmem:[%s2] sm:$0xff]
        %v211 = vld [vmem:[%s2 + $0x8] sm:$0xff]
        %v212 = vld [vmem:[%s2 + $0x10] sm:$0xff]
        %v213 = vld [vmem:[%s2 + $0x18] sm:$0xff]
        %v214 = vld [vmem:[%s183] sm:$0xff]
        %v215 = vld [vmem:[%s183 + $0x8] sm:$0xff]
        %v216 = vld [vmem:[%s183 + $0x10] sm:$0xff]
        %v217 = vld [vmem:[%s183 + $0x18] sm:$0xff]
        %v218 = vadd.f32 %v214, %v215
        %v219 = vadd.f32 %v218, %v216
        %v220 = vadd.f32 %v219, %v217
        %v221 = vrot.slane %v220, 4
        %v222 = vadd.f32 %v220, %v221
        %v223 = vrot.slane %v222, 2
        %v224 = vadd.f32 %v222, %v223
        %v225 = vrot.slane %v224, 1
        %v226 = vadd.f32 %v224, %v225
        %v227 = vmul.f32 %v214, %v214
        %v228 = vmul.f32 %v215, %v215
        %v229 = vmul.f32 %v216, %v216
        %v230 = vmul.f32 %v217, %v217
        %v231 = vadd.f32 %v227, %v228
        %v232 = vadd.f32 %v231, %v229
        %v233 = vadd.f32 %v232, %v230
        %v234 = vrot.slane %v233, 4
        %v235 = vadd.f32 %v233, %v234
        %v236 = vrot.slane %v235, 2
        %v237 = vadd.f32 %v235, %v236
        %v238 = vrot.slane %v237, 1
        %v239 = vadd.f32 %v237, %v238
        %v240 = vmul.f32 %v226, 0.03125
        %v241 = vmul.f32 %v239, 0.03125
        %v242 = vmul.f32 %v240, %v240
        %v243 = vsub.f32 %v241, %v242
        %v244 = vmax.f32 %v243, 0.0
        %v245 = vadd.f32 %v244, 1e-05
        %v246 = vrsqrt.pop %v245
        %v247 = vsub.f32 %v214, %v240
        %v248 = vsub.f32 %v215, %v240
        %v249 = vsub.f32 %v216, %v240
        %v250 = vsub.f32 %v217, %v240
        %v251 = vmul.f32 %v247, %v246
        %v252 = vmul.f32 %v248, %v246
        %v253 = vmul.f32 %v249, %v246
        %v254 = vmul.f32 %v250, %v246
        %256 = vset.pattern.permute.xlu0 0
        %257 = vperm.xlu0 %256, %v206
        %v258 = vpop.permute.xlu0 %257
        %261 = vset.pattern.permute.xlu0 0
        %262 = vperm.xlu0 %261, %v207
        %v263 = vpop.permute.xlu0 %262
        %266 = vset.pattern.permute.xlu0 0
        %267 = vperm.xlu0 %266, %v208
        %v268 = vpop.permute.xlu0 %267
        %271 = vset.pattern.permute.xlu0 0
        %272 = vperm.xlu0 %271, %v209
        %v273 = vpop.permute.xlu0 %272
        %v275 = vmul.f32 %v251, %v258
        %v276 = vmul.f32 %v252, %v263
        %v277 = vmul.f32 %v253, %v268
        %v278 = vmul.f32 %v254, %v273
        %280 = vset.pattern.permute.xlu0 0
        %281 = vperm.xlu0 %280, %v210
        %v282 = vpop.permute.xlu0 %281
        %285 = vset.pattern.permute.xlu0 0
        %286 = vperm.xlu0 %285, %v211
        %v287 = vpop.permute.xlu0 %286
        %290 = vset.pattern.permute.xlu0 0
        %291 = vperm.xlu0 %290, %v212
        %v292 = vpop.permute.xlu0 %291
        %295 = vset.pattern.permute.xlu0 0
        %296 = vperm.xlu0 %295, %v213
        %v297 = vpop.permute.xlu0 %296
        %v299 = vadd.f32 %v275, %v282
        %v300 = vadd.f32 %v276, %v287
        %v301 = vadd.f32 %v277, %v292
        %v302 = vadd.f32 %v278, %v297
        %303 = vst [vmem:[%s205] sm:$0xff] %v299
        %304 = vst [vmem:[%s205 + $0x8] sm:$0xff] %v300
        %305 = vst [vmem:[%s205 + $0x10] sm:$0xff] %v301
        %306 = vst [vmem:[%s205 + $0x18] sm:$0xff] %v302
        %s307 = sand.u32 %s112, 1
        %s308 = scalar_lea.sflag [#allocation4], %s307
        %s309 = sand.u32 %s112, 1
        %s310 = smul.addr %s309, 32
        %s311 = scalar_lea.vmem [#allocation5], %s310
        // Predicated region
        $region37: #{tpu_custom_call.1} parent=31 // pred_check
          %p312 = pneg %p122
        $region38: #{tpu_custom_call.1} parent=31 // pred_check_branch
          %314 = sbr.rel (%p312) target = $region40
        $region39: #{tpu_custom_call.1} parent=31 // pred_region
          %s316 = ssub.s32 512, 512
          %317 = vsyncadd %s308, %s316
          %s318 = smul.addr %s24, 8
          %s319 = sadd.s32 %s25, %s318
          %s320 = smul.addr %s319, 128
          %s321 = scalar_lea.hbm %s3, %s320
          %s322 = sshll.u32 %s311, 4
          %s323 = int_to_ptr.vmem [resolvable:$true] %s322
          %328 = dma.vmem_to_hbm [thread:$0]  %s323, 512, %s321, %s308, 128, 256, 8
        $region40: #{tpu_custom_call.1} parent=31 // pred_fallthru
          _
      $region32: #{tpu_custom_call.1} parent=5 // pred_fallthru
        _
      %p329 = scmp.le.s32.totalorder 2, %s15
      // Predicated region
      $region41: #{tpu_custom_call.1} parent=5 // pred_check
        %p330 = pneg %p329
      $region42: #{tpu_custom_call.1} parent=5 // pred_check_branch
        %332 = sbr.rel (%p330) target = $region44
      $region43: #{tpu_custom_call.1} parent=5 // pred_region
        %s333 = ssub.s32 %s15, 2
        // Predicated region
        $region45: #{tpu_custom_call.1} parent=43 // pred_check
          %p334 = pneg %p128
        $region46: #{tpu_custom_call.1} parent=43 // pred_check_branch
          %336 = sbr.rel (%p334) target = $region48
        $region47: #{tpu_custom_call.1} parent=43 // pred_region
          %s337 = sand.u32 %s113, 1
          %s338 = scalar_lea.sflag [#allocation4], %s337
          %s339 = sand.u32 %s113, 1
          %s340 = smul.addr %s339, 32
          %s341 = scalar_lea.vmem [#allocation5], %s340
          %342 = dma.done %s338, 512
        $region48: #{tpu_custom_call.1} parent=43 // pred_fallthru
          _
      $region44: #{tpu_custom_call.1} parent=5 // pred_fallthru
        _
    $region6: #{tpu_custom_call.1} parent=1 // loop_footer
      %s19 = sadd.s32 1, %s15
    $region7: #{tpu_custom_call.1} parent=1 // loop_footer_branch
      %14 = sbr.rel target = $region3
    $region8: #{tpu_custom_call.1} parent=1 // loop_exit
      _
    %343 = vsyncpa [#allocation3], 1
    %s344 = scalar_lea.sflag [#allocation3], 1
    %345 = vsyncpa %s344, 1
    %346 = vsyncpa [#allocation4], 1
    %s347 = scalar_lea.sflag [#allocation4], 1
    %348 = vsyncpa %s347, 1

</llo_original>
